<compile_context>
chip_gen: v5e
topology: v5e:2x2
jax: 0.10.0
libtpu: 0.0.40
codegen_flags: <defaults>
</compile_context>

<pallas_src>
import functools

import jax
import jax.numpy as jnp
from jax.experimental import pallas as pl
from jax.experimental.pallas import tpu as pltpu


def _linear_relu_kernel(x_ref, wt_ref, b_ref, o_ref):
    # x_ref : [B, IN]    (VMEM)
    # wt_ref: [IN, OUT]  (VMEM, weight pre-transposed once at init)
    # b_ref : [1, OUT]   (VMEM)
    # o_ref : [B, OUT]   (VMEM)
    y = jnp.dot(x_ref[...], wt_ref[...], preferred_element_type=jnp.float32)
    o_ref[...] = jnp.maximum(y + b_ref[...], 0.0).astype(o_ref.dtype)


def _linear_relu_pallas(x, w_t, b2d):
    """One-tile Pallas call: whole arrays live in VMEM, no grid / pipeline overhead."""
    B, in_feats = x.shape
    out_feats = w_t.shape[1]
    itemsize = jnp.dtype(x.dtype).itemsize
    cost = pl.CostEstimate(
        flops=2 * B * in_feats * out_feats,          # true (unpadded) work
        transcendentals=0,
        bytes_accessed=(x.size + w_t.size + b2d.size + B * out_feats) * itemsize,
    )
    return pl.pallas_call(
        _linear_relu_kernel,
        out_shape=jax.ShapeDtypeStruct((B, out_feats), x.dtype),
        in_specs=[
            pl.BlockSpec(memory_space=pltpu.MemorySpace.VMEM),
            pl.BlockSpec(memory_space=pltpu.MemorySpace.VMEM),
            pl.BlockSpec(memory_space=pltpu.MemorySpace.VMEM),
        ],
        out_specs=pl.BlockSpec(memory_space=pltpu.MemorySpace.VMEM),
        cost_estimate=cost,
    )(x, w_t, b2d)


# Below this output size, a fused plain-jnp op beats the pallas_call boundary cost.
_PALLAS_MIN_OUT_ELEMS = 4096


@functools.partial(jax.jit, static_argnames=("force_pallas",))
def linear_relu(x, w_t, b2d, *, force_pallas=False):
    """TestListModel.forward: returns [relu(x @ W.T + b)].

    x   : [B, in_feats]        float32
    w_t : [in_feats, out_feats] float32 (weight pre-transposed at init)
    b2d : [1, out_feats]        float32 (bias pre-reshaped at init)
    """
    B = x.shape[0]
    out_feats = w_t.shape[1]
    if force_pallas or B * out_feats >= _PALLAS_MIN_OUT_ELEMS:
        y = _linear_relu_pallas(x, w_t, b2d)
    else:
        # Tiny problem: let XLA fuse the whole thing into the caller.
        y = jnp.maximum(x @ w_t + b2d, 0.0)
    return [y]


def init_linear_params(key, in_feats, out_feats):
    """Deterministic PyTorch-style nn.Linear init: U(-1/sqrt(in), 1/sqrt(in))."""
    kw, kb = jax.random.split(key)
    bound = 1.0 / (in_feats ** 0.5)
    weight = jax.random.uniform(kw, (out_feats, in_feats), jnp.float32,
                                minval=-bound, maxval=bound)
    bias = jax.random.uniform(kb, (out_feats,), jnp.float32,
                              minval=-bound, maxval=bound)
    return weight, bias


def prepare_params(weight, bias):
    """One-time (init) layout prep: weight [OUT,IN] -> [IN,OUT], bias -> [1,OUT].

    Hoisted out of the per-call path so linear_relu issues no extra XLA ops.
    (On v6e, casting w_t to bf16 here would halve the weight DMA while keeping the
    f32 accumulate; left in f32 since it is irrelevant at this problem size.)
    """
    w_t = jnp.asarray(weight).T.copy()
    b2d = jnp.asarray(bias).reshape(1, -1)
    return w_t, b2d


if __name__ == "__main__":
    NUM_CLASSES = 2
    batch = 8
    in_feats = 32
    out_feats = NUM_CLASSES

    key = jax.random.PRNGKey(0)
    kx, kp = jax.random.split(key)
    x = jax.random.normal(kx, (batch, in_feats), dtype=jnp.float32)
    weight, bias = init_linear_params(kp, in_feats, out_feats)
    w_t, b2d = prepare_params(weight, bias)           # hoisted, one-time

    # Run the Pallas kernel path explicitly (forced, so the kernel is exercised
    # even though the size-gated dispatch would pick the fused-jnp path here).
    outs = linear_relu(x, w_t, b2d, force_pallas=True)
    y = jax.block_until_ready(outs[0])

    # Also exercise the default (size-gated) dispatch for parity.
    outs_fused = linear_relu(x, w_t, b2d)
    y_fused = jax.block_until_ready(outs_fused[0])

    # Reference check (plain JAX, original PyTorch semantics: x @ W.T + b, relu).
    ref = jnp.maximum(x @ weight.T + bias, 0.0)
    assert isinstance(outs, list) and len(outs) == 1
    assert y.shape == (batch, out_feats), f"bad shape {y.shape}"
    assert jnp.allclose(y, ref, atol=1e-5, rtol=1e-5), "pallas kernel mismatch vs reference"
    assert jnp.allclose(y_fused, ref, atol=1e-5, rtol=1e-5), "fused path mismatch vs reference"

    print("KERNEL_OK")
</pallas_src>

<mosaic_0001>
module attributes {stable_mosaic.version = 11 : i64} {
  func.func @_linear_relu_kernel(%arg0: memref<8x32xf32, #tpu.memory_space<vmem>>, %arg1: memref<32x2xf32, #tpu.memory_space<vmem>>, %arg2: memref<1x2xf32, #tpu.memory_space<vmem>>, %arg3: memref<8x2xf32, #tpu.memory_space<vmem>>) attributes {dimension_semantics = [], scalar_prefetch = 0 : i64, scratch_operands = 0 : i64, tpu.core_type = #tpu.core_type<tc>} {
    %c0 = arith.constant 0 : index
    %c0_0 = arith.constant 0 : index
    %0 = vector.load %arg0[%c0, %c0_0] : memref<8x32xf32, #tpu.memory_space<vmem>>, vector<8x32xf32>
    %c0_1 = arith.constant 0 : index
    %c0_2 = arith.constant 0 : index
    %1 = vector.load %arg1[%c0_1, %c0_2] : memref<32x2xf32, #tpu.memory_space<vmem>>, vector<32x2xf32>
    %cst = arith.constant dense<0.000000e+00> : vector<8x2xf32>
    %2 = tpu.matmul %0, %1, %cst {dimension_numbers = #tpu.dot_dimension_numbers<[1], [0], [0], [1], [0, 0, 1, 1], [], []>} : vector<8x32xf32>, vector<32x2xf32>, vector<8x2xf32> -> vector<8x2xf32>
    %c0_3 = arith.constant 0 : index
    %c0_4 = arith.constant 0 : index
    %3 = vector.load %arg2[%c0_3, %c0_4] : memref<1x2xf32, #tpu.memory_space<vmem>>, vector<1x2xf32>
    %4 = vector.broadcast %3 : vector<1x2xf32> to vector<8x2xf32>
    %5 = arith.addf %2, %4 : vector<8x2xf32>
    %cst_5 = arith.constant 0.000000e+00 : f32
    %6 = vector.broadcast %cst_5 : f32 to vector<8x2xf32>
    %7 = arith.maximumf %5, %6 : vector<8x2xf32>
    %c0_6 = arith.constant 0 : index
    %c0_7 = arith.constant 0 : index
    %8 = vector.load %arg3[%c0_6, %c0_7] : memref<8x2xf32, #tpu.memory_space<vmem>>, vector<8x2xf32>
    tpu.vector_store %arg3[%c0_6, %c0_7], %7 {strides = array<i32>} : memref<8x2xf32, #tpu.memory_space<vmem>>, vector<8x2xf32>,
    return
  }
}

</mosaic_0001>

<llo_original>
// kernel: linear_relu.1
$region0: #{linear_relu.1}
  #allocation0 [shape = 'u32[]', space=smem, size = 0x4, offset = 0x4, fixed_abs, tag = 'smem constant byte address 0x4 - core index']
  #allocation1 [shape = 'u32[72,128]{1,0:T(1,128)}', space=vmem, size = 0x9000, scoped, tag = 'internal scratch']
  %s0 = inlined_call_operand.vmem [shape: f32[8,32], index: 0, kind: input, shape index: {}]
  %s1 = inlined_call_operand.vmem [shape: f32[32,2], index: 1, kind: input, shape index: {}]
  %s2 = inlined_call_operand.vmem [shape: f32[1,2], index: 2, kind: input, shape index: {}]
  %s3 = inlined_call_operand.vmem [shape: f32[8,2], index: 3, kind: output, shape index: {}]
  %s4 = sld [smem:[#allocation0]]
  $region22: #{linear_relu.1} parent=0
    _
  %s6 = ssub.s32 1, %s4
  %s7 = scalar_select 0, %s6, %s4
  // Predicated region
  $region2: #{linear_relu.1} parent=0 // pred_check
    _
  $region3: #{linear_relu.1} parent=0 // pred_check_branch
    %9 = sbr.rel (0) target = $region5
  $region4: #{linear_relu.1} parent=0 // pred_region
    _
  $region5: #{linear_relu.1} parent=0 // pred_fallthru
    _
  // Predicated region
  $region6: #{linear_relu.1} parent=0 // pred_check
    _
  $region7: #{linear_relu.1} parent=0 // pred_check_branch
    %11 = sbr.rel (0) target = $region9
  $region8: #{linear_relu.1} parent=0 // pred_region
    _
  $region9: #{linear_relu.1} parent=0 // pred_fallthru
    _
  // Predicated region
  $region10: #{linear_relu.1} parent=0 // pred_check
    _
  $region11: #{linear_relu.1} parent=0 // pred_check_branch
    %13 = sbr.rel (0) target = $region13
  $region12: #{linear_relu.1} parent=0 // pred_region
    _
  $region13: #{linear_relu.1} parent=0 // pred_fallthru
    _
  %v14 = vld [vmem:[%s0] sm:$0xff]
  %v15 = vld [vmem:[%s1] sm:$0xff]
  %v16 = vld [vmem:[%s1 + $0x8] sm:$0xff]
  %v17 = vld [vmem:[%s1 + $0x10] sm:$0xff]
  %v18 = vld [vmem:[%s1 + $0x18] sm:$0xff]
  %v19 = vld [vmem:[%s2] sm:$0x1]
  %v21 = vperm.slane %v19, 0
  %vm23 = vcmask 261120
  %v25 = vsel %vm23, %v14, 0
  %27 = vmatpush.msra.mxu0 0.0
  %28 = vmatpush.msra.mxu0 0.0
  %29 = vmatpush.msra.mxu0 0.0
  %30 = vmatpush.msra.mxu0 0.0
  %31 = vmatpush.msra.mxu0 0.0
  %32 = vmatpush.msra.mxu0 0.0
  %33 = vmatpush.msra.mxu0 0.0
  %34 = vmatpush.msra.mxu0 0.0
  %35 = vmatpush.msra.mxu0 0.0
  %36 = vmatpush.msra.mxu0 0.0
  %37 = vmatpush.msra.mxu0 0.0
  %38 = vmatpush.msra.mxu0 0.0
  %39 = vmatpush.msra.mxu0 %v18
  %40 = vmatpush.msra.mxu0 %v17
  %41 = vmatpush.msra.mxu0 %v16
  %42 = vmatpush.msra.mxu0 %v15
  %43 = vmatmul.f32.gmra.mxu0 %v25
  %v44 = vpop.f32.mrf.mxu0
  %v45 = vadd.f32 %v21, %v44
  %46 = vdwg.mxu0
  %v47 = vmax.f32 %v45, 0.0
  %vm48 = vcmask 15360
  %49 = vst.msk [vmem:[%s3] sm:$0xff] %vm48, %v47
  // Predicated region
  $region14: #{linear_relu.1} parent=0 // pred_check
    _
  $region15: #{linear_relu.1} parent=0 // pred_check_branch
    %51 = sbr.rel (0) target = $region17
  $region16: #{linear_relu.1} parent=0 // pred_region
    _
  $region17: #{linear_relu.1} parent=0 // pred_fallthru
    _
  // Predicated region
  $region18: #{linear_relu.1} parent=0 // pred_check
    _
  $region19: #{linear_relu.1} parent=0 // pred_check_branch
    %53 = sbr.rel (0) target = $region21
  $region20: #{linear_relu.1} parent=0 // pred_region
    _
  $region21: #{linear_relu.1} parent=0 // pred_fallthru
    _

</llo_original>
